<compile_context>
chip_gen: v7x
topology: tpu7x:2x2x1
jax: 0.10.0
libtpu: 0.0.40
codegen_flags: <defaults>
</compile_context>

<pallas_src>
import jax
import jax.numpy as jnp
from jax.experimental import pallas as pl
from jax.experimental.pallas import tpu as pltpu

BN_EPS = 1e-5


def _round_up(a, b):
    return ((a + b - 1) // b) * b


# --------------------------------------------------------------------------------------
# Pass 1: tiled conv (im2col matmul) + per-tile BatchNorm partial statistics
# --------------------------------------------------------------------------------------
def _conv_stats_kernel(xcol_ref, w_ref, conv_ref, psum_ref, psumsq_ref):
    # xcol_ref: (tile_p, K) bf16 im2col patches     (streamed per grid step)
    # w_ref:    (K, Cout)   bf16 conv weights       (same block every step -> VMEM resident)
    # conv_ref: (tile_p, Cout) f32 conv output tile
    # psum_ref / psumsq_ref: (8, Cout) f32 per-tile partial sums (8 identical rows so the
    #                        block satisfies the (8, 128)-or-full-dim rule).
    conv = jnp.dot(xcol_ref[...], w_ref[...], preferred_element_type=jnp.float32)
    conv_ref[...] = conv
    s = jnp.sum(conv, axis=0, keepdims=True)            # (1, Cout), f32 accumulators
    sq = jnp.sum(conv * conv, axis=0, keepdims=True)    # (1, Cout)
    psum_ref[...] = jnp.broadcast_to(s, psum_ref.shape)
    psumsq_ref[...] = jnp.broadcast_to(sq, psumsq_ref.shape)


# --------------------------------------------------------------------------------------
# Pass 2: normalize + ReLU on a lane-dense (N*H, W*Cout) view, folded BN affine
# --------------------------------------------------------------------------------------
def _bn_relu_kernel(conv_ref, scale_ref, bias_ref, out_ref):
    # conv_ref: (tile_r, W*Cout) f32; scale/bias: (1, W*Cout) f32 (resident, per-channel
    # constants pre-tiled per pixel in the wrapper -> no per-step rsqrt / re-broadcast).
    y = conv_ref[...] * scale_ref[...] + bias_ref[...]
    out_ref[...] = jnp.maximum(y, 0.0)


def standard_block_forward(x, weight, gamma, beta, *, tile_p=1024, tile_rows=256):
    """x: (N, Cin, H, W) NCHW; weight: (Cout, Cin, 3, 3); gamma/beta: (Cout,).

    tile_p: rows of the (N*H*W, 9*Cin) im2col matrix per grid step (review: 512-2048).
    tile_rows: image rows (of width W*Cout lanes) per grid step in the normalize pass.
    """
    N, Cin, H, W = x.shape
    Cout = weight.shape[0]
    K = 9 * Cin
    P = N * H * W

    # ---- glue (pure data movement in XLA): NCHW -> NHWC, zero-pad, im2col ----
    x_nhwc = jnp.transpose(x, (0, 2, 3, 1)).astype(jnp.float32)
    xp = jnp.pad(x_nhwc, ((0, 0), (1, 1), (1, 1), (0, 0)))
    cols = [xp[:, kh:kh + H, kw:kw + W, :] for kh in range(3) for kw in range(3)]
    xcol = jnp.concatenate(cols, axis=-1).reshape(P, K)

    # bf16 operands for the MXU (f32 accumulation in-kernel): halves the HBM bytes of the
    # dominant xcol stream on v5e/v6e/v7x. BN math stays f32.
    xcol_bf = xcol.astype(jnp.bfloat16)
    # weight (Cout, Cin, kh, kw) -> (kh, kw, Cin, Cout) -> (9*Cin, Cout), matching im2col order
    w2 = jnp.transpose(weight, (2, 3, 1, 0)).reshape(K, Cout).astype(jnp.bfloat16)

    # ---- pass 1: tiled conv + partial BN stats ----
    tile_p = max(8, _round_up(min(tile_p, _round_up(P, 8)), 8))
    p_pad = _round_up(P, tile_p)
    if p_pad != P:
        # zero-padded rows give conv == 0 exactly -> contribute nothing to sum / sumsq.
        xcol_bf = jnp.pad(xcol_bf, ((0, p_pad - P), (0, 0)))
    n_tiles = p_pad // tile_p

    conv_pad, psum, psumsq = pl.pallas_call(
        _conv_stats_kernel,
        grid=(n_tiles,),
        in_specs=[
            pl.BlockSpec((tile_p, K), lambda i: (i, 0)),
            pl.BlockSpec((K, Cout), lambda i: (0, 0)),      # weight stays VMEM-resident
        ],
        out_specs=[
            pl.BlockSpec((tile_p, Cout), lambda i: (i, 0)),
            pl.BlockSpec((8, Cout), lambda i: (i, 0)),
            pl.BlockSpec((8, Cout), lambda i: (i, 0)),
        ],
        out_shape=[
            jax.ShapeDtypeStruct((p_pad, Cout), jnp.float32),
            jax.ShapeDtypeStruct((n_tiles * 8, Cout), jnp.float32),
            jax.ShapeDtypeStruct((n_tiles * 8, Cout), jnp.float32),
        ],
        compiler_params=pltpu.CompilerParams(dimension_semantics=("parallel",)),
    )(xcol_bf, w2)

    # ---- finalize statistics over ALL tiles (tiny XLA), fold the BN affine once ----
    total_sum = psum.reshape(n_tiles, 8, Cout)[:, 0, :].sum(axis=0)      # (Cout,)
    total_sq = psumsq.reshape(n_tiles, 8, Cout)[:, 0, :].sum(axis=0)     # (Cout,)
    inv_p = 1.0 / float(P)
    mean = total_sum * inv_p
    var = total_sq * inv_p - mean * mean            # biased variance (PyTorch training BN)
    scale = gamma.astype(jnp.float32) * jax.lax.rsqrt(var + BN_EPS)
    bias = beta.astype(jnp.float32) - mean * scale

    # ---- pass 2: lane-dense normalize + ReLU ----
    conv_flat = conv_pad[:P]                         # (P, Cout) f32 — the conv_out result
    R = N * H
    WC = W * Cout                                    # 128 lanes for the demo shapes
    conv_rows = conv_flat.reshape(R, WC)             # same bytes, lane-dense view
    scale_row = jnp.tile(scale, W).reshape(1, WC)    # per-pixel repeat of per-channel consts
    bias_row = jnp.tile(bias, W).reshape(1, WC)

    tile_r = max(8, _round_up(min(tile_rows, _round_up(R, 8)), 8))
    r_pad = _round_up(R, tile_r)
    if r_pad != R:
        conv_rows = jnp.pad(conv_rows, ((0, r_pad - R), (0, 0)))

    out_rows = pl.pallas_call(
        _bn_relu_kernel,
        grid=(r_pad // tile_r,),
        in_specs=[
            pl.BlockSpec((tile_r, WC), lambda i: (i, 0)),
            pl.BlockSpec((1, WC), lambda i: (0, 0)),         # resident
            pl.BlockSpec((1, WC), lambda i: (0, 0)),         # resident
        ],
        out_specs=pl.BlockSpec((tile_r, WC), lambda i: (i, 0)),
        out_shape=jax.ShapeDtypeStruct((r_pad, WC), jnp.float32),
        compiler_params=pltpu.CompilerParams(dimension_semantics=("parallel",)),
    )(conv_rows, scale_row, bias_row)

    # back to PyTorch NCHW layout
    out = jnp.transpose(out_rows[:R].reshape(N, H, W, Cout), (0, 3, 1, 2))
    conv_out = jnp.transpose(conv_flat.reshape(N, H, W, Cout), (0, 3, 1, 2))
    return out, conv_out


# --------------------------------------------------------------------------------------
# Pure-JAX reference for correctness checking
# --------------------------------------------------------------------------------------
def _reference(x, weight, gamma, beta, *, quantize_bf16=False):
    if quantize_bf16:
        # same operand quantization the kernel applies (bf16 operands, f32 accumulation)
        x = x.astype(jnp.bfloat16).astype(jnp.float32)
        weight = weight.astype(jnp.bfloat16).astype(jnp.float32)
    conv = jax.lax.conv_general_dilated(
        x, weight, window_strides=(1, 1), padding=((1, 1), (1, 1)),
        dimension_numbers=("NCHW", "OIHW", "NCHW"),
        precision=jax.lax.Precision.HIGHEST)
    mean = jnp.mean(conv, axis=(0, 2, 3), keepdims=True)
    var = jnp.mean((conv - mean) ** 2, axis=(0, 2, 3), keepdims=True)
    y = (conv - mean) * jax.lax.rsqrt(var + BN_EPS)
    y = y * gamma.reshape(1, -1, 1, 1) + beta.reshape(1, -1, 1, 1)
    return jnp.maximum(y, 0.0), conv


if __name__ == "__main__":
    key = jax.random.PRNGKey(0)
    k1, k2, k3, k4 = jax.random.split(key, 4)

    # small shapes consistent with the module: batch=2, in_channels=4, out_channels=8, 16x16
    N, Cin, Cout, H, W = 2, 4, 8, 16, 16
    x = jax.random.normal(k1, (N, Cin, H, W), jnp.float32)

    # deterministic synthetic parameters (PyTorch default init would be gamma=1, beta=0)
    weight = 0.1 * jax.random.normal(k2, (Cout, Cin, 3, 3), jnp.float32)
    gamma = 1.0 + 0.1 * jax.random.normal(k3, (Cout,), jnp.float32)
    beta = 0.1 * jax.random.normal(k4, (Cout,), jnp.float32)

    # small explicit tiles so the multi-tile stats path is exercised at toy shapes
    # (production defaults: tile_p=1024, tile_rows=256 per the 512-2048 guidance).
    out, conv_out = jax.block_until_ready(
        standard_block_forward(x, weight, gamma, beta, tile_p=128, tile_rows=16))

    assert out.shape == (N, Cout, H, W) and conv_out.shape == (N, Cout, H, W)

    # Tight check against a reference using the same bf16 operand quantization
    # (validates the conv/BN/ReLU algorithm itself to f32 accumulation accuracy).
    ref_out_q, ref_conv_q = _reference(x, weight, gamma, beta, quantize_bf16=True)
    assert jnp.allclose(conv_out, ref_conv_q, atol=1e-3, rtol=1e-3), "conv mismatch (bf16 ref)"
    assert jnp.allclose(out, ref_out_q, atol=1e-3, rtol=1e-3), "bn+relu mismatch (bf16 ref)"

    # Loose check against the full-f32 PyTorch-equivalent reference (bounds the
    # bf16-operand quantization error recommended by the perf review).
    ref_out, ref_conv = _reference(x, weight, gamma, beta, quantize_bf16=False)
    assert jnp.allclose(conv_out, ref_conv, atol=5e-2, rtol=5e-2), "conv mismatch (f32 ref)"
    assert jnp.allclose(out, ref_out, atol=5e-2, rtol=5e-2), "bn+relu mismatch (f32 ref)"

    print("KERNEL_OK")
</pallas_src>

<mosaic_0001>
module attributes {stable_mosaic.version = 11 : i64} {
  func.func @_conv_stats_kernel(%arg0: i32, %arg1: memref<128x36xbf16, #tpu.memory_space<vmem>>, %arg2: memref<36x8xbf16, #tpu.memory_space<vmem>>, %arg3: memref<128x8xf32, #tpu.memory_space<vmem>>, %arg4: memref<8x8xf32, #tpu.memory_space<vmem>>, %arg5: memref<8x8xf32, #tpu.memory_space<vmem>>) attributes {dimension_semantics = [#tpu.dimension_semantics<parallel>], iteration_bounds = array<i64: 4>, scalar_prefetch = 0 : i64, scratch_operands = 0 : i64, tpu.core_type = #tpu.core_type<tc>, window_params = [{transform_indices = @transform_0, window_bounds = array<i64: 128, 36>}, {pipeline_mode = #tpu.pipeline_mode<synchronous>, transform_indices = @transform_1, window_bounds = array<i64: 36, 8>}, {transform_indices = @transform_2, window_bounds = array<i64: 128, 8>}, {transform_indices = @transform_3, window_bounds = array<i64: 8, 8>}, {transform_indices = @transform_4, window_bounds = array<i64: 8, 8>}]} {
    %c0 = arith.constant 0 : index
    %c0_0 = arith.constant 0 : index
    %0 = vector.load %arg1[%c0, %c0_0] : memref<128x36xbf16, #tpu.memory_space<vmem>>, vector<128x36xbf16>
    %c0_1 = arith.constant 0 : index
    %c0_2 = arith.constant 0 : index
    %1 = vector.load %arg2[%c0_1, %c0_2] : memref<36x8xbf16, #tpu.memory_space<vmem>>, vector<36x8xbf16>
    %cst = arith.constant dense<0.000000e+00> : vector<128x8xf32>
    %2 = tpu.matmul %0, %1, %cst {dimension_numbers = #tpu.dot_dimension_numbers<[1], [0], [0], [1], [0, 0, 1, 1], [], []>} : vector<128x36xbf16>, vector<36x8xbf16>, vector<128x8xf32> -> vector<128x8xf32>
    %c0_3 = arith.constant 0 : index
    %c0_4 = arith.constant 0 : index
    %3 = vector.load %arg3[%c0_3, %c0_4] : memref<128x8xf32, #tpu.memory_space<vmem>>, vector<128x8xf32>
    tpu.vector_store %arg3[%c0_3, %c0_4], %2 {strides = array<i32>} : memref<128x8xf32, #tpu.memory_space<vmem>>, vector<128x8xf32>,
    %cst_5 = arith.constant dense<0.000000e+00> : vector<8xf32>
    %4 = vector.multi_reduction <add>, %2, %cst_5 [0] : vector<128x8xf32> to vector<8xf32>
    %5 = vector.shape_cast %4 : vector<8xf32> to vector<1x8xf32>
    %6 = arith.mulf %2, %2 : vector<128x8xf32>
    %cst_6 = arith.constant dense<0.000000e+00> : vector<8xf32>
    %7 = vector.multi_reduction <add>, %6, %cst_6 [0] : vector<128x8xf32> to vector<8xf32>
    %8 = vector.shape_cast %7 : vector<8xf32> to vector<1x8xf32>
    %9 = vector.shape_cast %5 : vector<1x8xf32> to vector<1x8xf32>
    %10 = vector.broadcast %9 : vector<1x8xf32> to vector<8x8xf32>
    %c0_7 = arith.constant 0 : index
    %c0_8 = arith.constant 0 : index
    %11 = vector.load %arg4[%c0_7, %c0_8] : memref<8x8xf32, #tpu.memory_space<vmem>>, vector<8x8xf32>
    tpu.vector_store %arg4[%c0_7, %c0_8], %10 {strides = array<i32>} : memref<8x8xf32, #tpu.memory_space<vmem>>, vector<8x8xf32>,
    %12 = vector.shape_cast %8 : vector<1x8xf32> to vector<1x8xf32>
    %13 = vector.broadcast %12 : vector<1x8xf32> to vector<8x8xf32>
    %c0_9 = arith.constant 0 : index
    %c0_10 = arith.constant 0 : index
    %14 = vector.load %arg5[%c0_9, %c0_10] : memref<8x8xf32, #tpu.memory_space<vmem>>, vector<8x8xf32>
    tpu.vector_store %arg5[%c0_9, %c0_10], %13 {strides = array<i32>} : memref<8x8xf32, #tpu.memory_space<vmem>>, vector<8x8xf32>,
    return
  }
  func.func @transform_0(%arg0: i32) -> (i32, i32) {
    %c0_i32 = arith.constant 0 : i32
    %c0_i32_0 = arith.constant 0 : i32
    return %arg0, %c0_i32 : i32, i32
  }
  func.func @transform_1(%arg0: i32) -> (i32, i32) {
    %c0_i32 = arith.constant 0 : i32
    %c0_i32_0 = arith.constant 0 : i32
    %c0_i32_1 = arith.constant 0 : i32
    return %c0_i32, %c0_i32_0 : i32, i32
  }
  func.func @transform_2(%arg0: i32) -> (i32, i32) {
    %c0_i32 = arith.constant 0 : i32
    %c0_i32_0 = arith.constant 0 : i32
    return %arg0, %c0_i32 : i32, i32
  }
  func.func @transform_3(%arg0: i32) -> (i32, i32) {
    %c0_i32 = arith.constant 0 : i32
    %c0_i32_0 = arith.constant 0 : i32
    return %arg0, %c0_i32 : i32, i32
  }
  func.func @transform_4(%arg0: i32) -> (i32, i32) {
    %c0_i32 = arith.constant 0 : i32
    %c0_i32_0 = arith.constant 0 : i32
    return %arg0, %c0_i32 : i32, i32
  }
}

</mosaic_0001>

<llo_original>
// kernel: tpu_custom_call.1
$region0: #{tpu_custom_call.1}
  #allocation0 [shape = 'u32[]', space=smem, size = 0x4, offset = 0x4, fixed_abs, tag = 'smem constant byte address 0x4 - core index']
  #allocation1 [shape = 'u32[144,128]{1,0:T(1,128)}', space=vmem, size = 0x12000, scoped, tag = 'internal scratch']
  %s0 = inlined_call_operand.vmem [shape: bf16[512,36], index: 0, kind: input, shape index: {}]
  %s1 = inlined_call_operand.vmem [shape: bf16[36,8], index: 1, kind: input, shape index: {}]
  %s2 = inlined_call_operand.vmem [shape: f32[512,8], index: 2, kind: output, shape index: {0}]
  %s3 = inlined_call_operand.vmem [shape: f32[32,8], index: 3, kind: output, shape index: {1}]
  %s4 = inlined_call_operand.vmem [shape: f32[32,8], index: 4, kind: output, shape index: {2}]
  %5 = xla_tuple %s2, %s3, %s4
  %s6 = sld [smem:[#allocation0]]
  $region57: #{tpu_custom_call.1} parent=0
    _
  %s8 = ssub.s32 1, %s6
  %s9 = scalar_select 0, %s8, %s6
  loop: start=0, step=1, limit=6
  $region2: #{tpu_custom_call.1} parent=0 // loop_pre_header
    _
  $region3: #{tpu_custom_call.1} parent=0 // loop_header
    %s11 = sphi 0, %s15
    %p12 = scmp.ge.s32.totalorder %s11, 6
    %s21 = sphi 0, %s23
    %s24 = sphi 0, %s21
    %s25 = sphi 0, %s24
    %s41 = sphi 0, %s25
    %s45 = sphi 0, %s45
    %s47 = sphi 0, %s45
    %s48 = sphi 0, %s47
    %s62 = sphi 0, %s48
    %s68 = sphi 0, %s70
    %s71 = sphi 0, %s68
    %s72 = sphi 0, %s71
    %s88 = sphi 0, %s72
    %s94 = sphi 0, %s96
    %s97 = sphi 0, %s94
    %s98 = sphi 0, %s97
    %s114 = sphi 0, %s98
    %s120 = sphi 0, %s122
    %s123 = sphi 0, %s120
    %s124 = sphi 0, %s123
    %s140 = sphi 0, %s124
  $region4: #{tpu_custom_call.1} parent=0 // loop_header_branch
    %14 = sbr.rel (%p12) target = $region8
  $region5: #{tpu_custom_call.1} parent=0 // loop_body
    %s16 = ssub.s32 %s11, 1
    %s17 = ssub.s32 %s11, 2
    %s18 = sadd.s32 %s11, 1
    %s19 = ssub.s32 %s11, %s18
    %p20 = scmp.eq.s32.totalorder %s19, 0
    %s22 = sadd.s32 %s21, 1
    %s23 = scalar_select %p20, %s21, %s22
    %p26 = pneg %p20
    %p27 = scmp.eq.s32.totalorder %s11, 3
    %p28 = por %p26, %p27
    %p29 = scmp.ne.s32.totalorder %s21, %s24
    %p30 = scmp.eq.s32.totalorder %s11, 0
    %p31 = por %p29, %p30
    %p32 = scmp.ne.s32.totalorder %s21, %s24
    %p33 = scmp.eq.s32.totalorder %s16, 3
    %p34 = por %p32, %p33
    %p35 = scmp.ne.s32.totalorder %s24, %s25
    %p36 = scmp.eq.s32.totalorder %s16, 0
    %p37 = por %p35, %p36
    %p38 = scmp.ne.s32.totalorder %s24, %s25
    %p39 = scmp.eq.s32.totalorder %s17, 3
    %p40 = por %p38, %p39
    %p42 = scmp.ne.s32.totalorder %s25, %s41
    %p43 = scmp.eq.s32.totalorder %s17, 0
    %p44 = por %p42, %p43
    %s46 = sadd.s32 %s45, 1
    %p49 = scmp.eq.s32.totalorder %s11, 3
    %p50 = scmp.ne.s32.totalorder %s45, %s47
    %p51 = scmp.eq.s32.totalorder %s11, 0
    %p52 = por %p50, %p51
    %p53 = scmp.ne.s32.totalorder %s45, %s47
    %p54 = scmp.eq.s32.totalorder %s16, 3
    %p55 = por %p53, %p54
    %p56 = scmp.ne.s32.totalorder %s47, %s48
    %p57 = scmp.eq.s32.totalorder %s16, 0
    %p58 = por %p56, %p57
    %p59 = scmp.ne.s32.totalorder %s47, %s48
    %p60 = scmp.eq.s32.totalorder %s17, 3
    %p61 = por %p59, %p60
    %p63 = scmp.ne.s32.totalorder %s48, %s62
    %p64 = scmp.eq.s32.totalorder %s17, 0
    %p65 = por %p63, %p64
    %s66 = ssub.s32 %s11, %s18
    %p67 = scmp.eq.s32.totalorder %s66, 0
    %s69 = sadd.s32 %s68, 1
    %s70 = scalar_select %p67, %s68, %s69
    %p73 = pneg %p67
    %p74 = scmp.eq.s32.totalorder %s11, 3
    %p75 = por %p73, %p74
    %p76 = scmp.ne.s32.totalorder %s68, %s71
    %p77 = scmp.eq.s32.totalorder %s11, 0
    %p78 = por %p76, %p77
    %p79 = scmp.ne.s32.totalorder %s68, %s71
    %p80 = scmp.eq.s32.totalorder %s16, 3
    %p81 = por %p79, %p80
    %p82 = scmp.ne.s32.totalorder %s71, %s72
    %p83 = scmp.eq.s32.totalorder %s16, 0
    %p84 = por %p82, %p83
    %p85 = scmp.ne.s32.totalorder %s71, %s72
    %p86 = scmp.eq.s32.totalorder %s17, 3
    %p87 = por %p85, %p86
    %p89 = scmp.ne.s32.totalorder %s72, %s88
    %p90 = scmp.eq.s32.totalorder %s17, 0
    %p91 = por %p89, %p90
    %s92 = ssub.s32 %s11, %s18
    %p93 = scmp.eq.s32.totalorder %s92, 0
    %s95 = sadd.s32 %s94, 1
    %s96 = scalar_select %p93, %s94, %s95
    %p99 = pneg %p93
    %p100 = scmp.eq.s32.totalorder %s11, 3
    %p101 = por %p99, %p100
    %p102 = scmp.ne.s32.totalorder %s94, %s97
    %p103 = scmp.eq.s32.totalorder %s11, 0
    %p104 = por %p102, %p103
    %p105 = scmp.ne.s32.totalorder %s94, %s97
    %p106 = scmp.eq.s32.totalorder %s16, 3
    %p107 = por %p105, %p106
    %p108 = scmp.ne.s32.totalorder %s97, %s98
    %p109 = scmp.eq.s32.totalorder %s16, 0
    %p110 = por %p108, %p109
    %p111 = scmp.ne.s32.totalorder %s97, %s98
    %p112 = scmp.eq.s32.totalorder %s17, 3
    %p113 = por %p111, %p112
    %p115 = scmp.ne.s32.totalorder %s98, %s114
    %p116 = scmp.eq.s32.totalorder %s17, 0
    %p117 = por %p115, %p116
    %s118 = ssub.s32 %s11, %s18
    %p119 = scmp.eq.s32.totalorder %s118, 0
    %s121 = sadd.s32 %s120, 1
    %s122 = scalar_select %p119, %s120, %s121
    %p125 = pneg %p119
    %p126 = scmp.eq.s32.totalorder %s11, 3
    %p127 = por %p125, %p126
    %p128 = scmp.ne.s32.totalorder %s120, %s123
    %p129 = scmp.eq.s32.totalorder %s11, 0
    %p130 = por %p128, %p129
    %p131 = scmp.ne.s32.totalorder %s120, %s123
    %p132 = scmp.eq.s32.totalorder %s16, 3
    %p133 = por %p131, %p132
    %p134 = scmp.ne.s32.totalorder %s123, %s124
    %p135 = scmp.eq.s32.totalorder %s16, 0
    %p136 = por %p134, %p135
    %p137 = scmp.ne.s32.totalorder %s123, %s124
    %p138 = scmp.eq.s32.totalorder %s17, 3
    %p139 = por %p137, %p138
    %p141 = scmp.ne.s32.totalorder %s124, %s140
    %p142 = scmp.eq.s32.totalorder %s17, 0
    %p143 = por %p141, %p142
    %p144 = scmp.le.s32.totalorder 1, %s11
    %p145 = scmp.lt.s32.totalorder %s11, 5
    %p146 = pnand %p144, %p145
    %p147 = pneg %p146
    // Predicated region
    $region9: #{tpu_custom_call.1} parent=5 // pred_check
      _
    $region10: #{tpu_custom_call.1} parent=5 // pred_check_branch
      %149 = sbr.rel (%p146) target = $region12
    $region11: #{tpu_custom_call.1} parent=5 // pred_region
      %s150 = ssub.s32 %s11, 1
      // Predicated region
      $region13: #{tpu_custom_call.1} parent=11 // pred_check
        %p151 = pneg %p58
      $region14: #{tpu_custom_call.1} parent=11 // pred_check_branch
        %153 = sbr.rel (%p151) target = $region16
      $region15: #{tpu_custom_call.1} parent=11 // pred_region
        _
      $region16: #{tpu_custom_call.1} parent=11 // pred_fallthru
        _
    $region12: #{tpu_custom_call.1} parent=5 // pred_fallthru
      _
    %p154 = scmp.lt.s32.totalorder %s11, 4
    // Predicated region
    $region17: #{tpu_custom_call.1} parent=5 // pred_check
      %p155 = pneg %p154
    $region18: #{tpu_custom_call.1} parent=5 // pred_check_branch
      %157 = sbr.rel (%p155) target = $region20
    $region19: #{tpu_custom_call.1} parent=5 // pred_region
      // Predicated region
      $region21: #{tpu_custom_call.1} parent=19 // pred_check
        %p158 = pneg %p31
      $region22: #{tpu_custom_call.1} parent=19 // pred_check_branch
        %160 = sbr.rel (%p158) target = $region24
      $region23: #{tpu_custom_call.1} parent=19 // pred_region
        %s161 = smul.u32 16, %s11
        %p162 = scmp.lt.s32.totalorder %s161, 63
        %s163 = scalar_select %p162, %s161, 63
        %s164 = smul.addr %s163, 4
        %s165 = scalar_lea.vmem %s0, %s164
        %s166 = smul.u32 16, %s11
      $region24: #{tpu_custom_call.1} parent=19 // pred_fallthru
        _
    $region20: #{tpu_custom_call.1} parent=5 // pred_fallthru
      _
    %p167 = scmp.le.s32.totalorder 1, %s11
    %p168 = scmp.lt.s32.totalorder %s11, 5
    %p169 = pnand %p167, %p168
    %p170 = pneg %p169
    // Predicated region
    $region25: #{tpu_custom_call.1} parent=5 // pred_check
      _
    $region26: #{tpu_custom_call.1} parent=5 // pred_check_branch
      %172 = sbr.rel (%p169) target = $region28
    $region27: #{tpu_custom_call.1} parent=5 // pred_region
      %s173 = ssub.s32 %s11, 1
      %s174 = smul.u32 16, %s16
      %p175 = scmp.lt.s32.totalorder %s174, 63
      %s176 = scalar_select %p175, %s174, 63
      %s177 = smul.addr %s176, 4
      %s178 = scalar_lea.vmem %s0, %s177
      %p179 = pneg %p37
      %p180 = pneg %p34
      %p181 = pneg %p58
      %p182 = pneg %p55
      %p183 = pneg %p84
      %p184 = pneg %p81
      %s185 = smul.u32 16, %s16
      %p186 = scmp.lt.s32.totalorder %s185, 63
      %s187 = scalar_select %p186, %s185, 63
      %s188 = smul.addr %s187, 8
      %s189 = scalar_lea.vmem %s2, %s188
      %p190 = pneg %p110
      %p191 = pneg %p107
      %p192 = scmp.lt.s32.totalorder %s16, 3
      %s193 = scalar_select %p192, %s16, 3
      %s194 = smul.addr %s193, 8
      %s195 = scalar_lea.vmem %s3, %s194
      %p196 = pneg %p136
      %p197 = pneg %p133
      %p198 = scmp.lt.s32.totalorder %s16, 3
      %s199 = scalar_select %p198, %s16, 3
      %s200 = smul.addr %s199, 8
      %s201 = scalar_lea.vmem %s4, %s200
      %s202 = smul.u32 16, %s16
      %p203 = scmp.lt.s32.totalorder %s202, 63
      %s204 = scalar_select %p203, %s202, 63
      %s205 = smul.addr %s204, 4
      %s206 = scalar_lea.vmem %s0, %s205
      %s207 = smul.u32 16, %s16
      %s208 = smul.u32 16, %s16
      %p209 = scmp.lt.s32.totalorder %s208, 63
      %s210 = scalar_select %p209, %s208, 63
      %s211 = smul.addr %s210, 8
      %s212 = scalar_lea.vmem %s2, %s211
      %s213 = smul.u32 16, %s16
      %p214 = scmp.lt.s32.totalorder %s16, 3
      %s215 = scalar_select %p214, %s16, 3
      %s216 = smul.addr %s215, 8
      %s217 = scalar_lea.vmem %s3, %s216
      %p218 = scmp.lt.s32.totalorder %s16, 3
      %s219 = scalar_select %p218, %s16, 3
      %s220 = smul.addr %s219, 8
      %s221 = scalar_lea.vmem %s4, %s220
      %v223 = vld [vmem:[%s206] sm:$0xf]
      %v224 = vld [vmem:[%s206 + $0x4] sm:$0xf]
      %v225 = vld [vmem:[%s206 + $0x8] sm:$0xf]
      %v226 = vld [vmem:[%s206 + $0xc] sm:$0xf]
      %v227 = vld [vmem:[%s206 + $0x10] sm:$0xf]
      %v228 = vld [vmem:[%s206 + $0x14] sm:$0xf]
      %v229 = vld [vmem:[%s206 + $0x18] sm:$0xf]
      %v230 = vld [vmem:[%s206 + $0x1c] sm:$0xf]
      %v231 = vld [vmem:[%s206 + $0x20] sm:$0xf]
      %v232 = vld [vmem:[%s206 + $0x24] sm:$0xf]
      %v233 = vld [vmem:[%s206 + $0x28] sm:$0xf]
      %v234 = vld [vmem:[%s206 + $0x2c] sm:$0xf]
      %v235 = vld [vmem:[%s206 + $0x30] sm:$0xf]
      %v236 = vld [vmem:[%s206 + $0x34] sm:$0xf]
      %v237 = vld [vmem:[%s206 + $0x38] sm:$0xf]
      %v238 = vld [vmem:[%s206 + $0x3c] sm:$0xf]
      %v239 = vld [vmem:[%s1] sm:$0xf]
      %v240 = vld [vmem:[%s1 + $0x4] sm:$0xf]
      %v241 = vld [vmem:[%s1 + $0x8] sm:$0xf]
      %v242 = vld [vmem:[%s1 + $0xc] sm:$0xf]
      %v243 = vld [vmem:[%s1 + $0x10] sm:$0x3]
      %v260 = vunpack.c.l.b16 %v223
      %v261 = vunpack.c.l.b16 %v224
      %v262 = vunpack.c.l.b16 %v225
      %v263 = vunpack.c.l.b16 %v226
      %v264 = vunpack.c.l.b16 %v227
      %v265 = vunpack.c.l.b16 %v228
      %v266 = vunpack.c.l.b16 %v229
      %v267 = vunpack.c.l.b16 %v230
      %v268 = vunpack.c.l.b16 %v231
      %v269 = vunpack.c.l.b16 %v232
      %v270 = vunpack.c.l.b16 %v233
      %v271 = vunpack.c.l.b16 %v234
      %v272 = vunpack.c.l.b16 %v235
      %v273 = vunpack.c.l.b16 %v236
      %v274 = vunpack.c.l.b16 %v237
      %v275 = vunpack.c.l.b16 %v238
      %v276 = vpack.c.b16 %v261, %v260
      %v277 = vpack.c.b16 %v263, %v262
      %v278 = vpack.c.b16 %v265, %v264
      %v279 = vpack.c.b16 %v267, %v266
      %v280 = vpack.c.b16 %v269, %v268
      %v281 = vpack.c.b16 %v271, %v270
      %v282 = vpack.c.b16 %v273, %v272
      %v283 = vpack.c.b16 %v275, %v274
      %v289 = vunpack.c.l.b16 %v239
      %v290 = vunpack.c.l.b16 %v240
      %v291 = vunpack.c.l.b16 %v241
      %v292 = vunpack.c.l.b16 %v242
      %v293 = vunpack.c.l.b16 %v243
      %v294 = vpack.c.b16 %v290, %v289
      %v295 = vpack.c.b16 %v292, %v291
      %v296 = vpack.c.b16 %v293, %v293
      %vm299 = vcmask 293888
      %v301 = vsel %vm299, %v276, 0
      %v304 = vsel %vm299, %v277, 0
      %v307 = vsel %vm299, %v278, 0
      %v310 = vsel %vm299, %v279, 0
      %v313 = vsel %vm299, %v280, 0
      %v316 = vsel %vm299, %v281, 0
      %v319 = vsel %vm299, %v282, 0
      %v322 = vsel %vm299, %v283, 0
      %vm324 = vcmask 1041408
      %v326 = vsel %vm324, %v296, 0
      %328 = vmatprep.subr.bf16.mxu0 0
      %329 = vmatpush1.bf16.msra.mxu0 %v294
      %330 = vmatprep.subr.bf16.mxu0 0
      %331 = vmatpush1.bf16.msra.mxu0 %v295
      %332 = vmatprep.subr.bf16.mxu0 0
      %333 = vmatpush1.bf16.msra.mxu0 %v326
      %334 = vmatprep.subr.bf16.mxu0 0
      %335 = vmatpush1.bf16.msra.mxu0 0
      %336 = vmatprep.subr.bf16.mxu0 0
      %337 = vmatpush1.bf16.msra.mxu0 0
      %338 = vmatprep.subr.bf16.mxu0 0
      %339 = vmatpush1.bf16.msra.mxu0 0
      %340 = vmatprep.subr.bf16.mxu0 0
      %341 = vmatpush1.bf16.msra.mxu0 0
      %342 = vmatprep.subr.bf16.mxu0 0
      %343 = vmatpush1.bf16.msra.mxu0 0
      %344 = vmatprep.subr.bf16.mxu0 0
      %345 = vmatpush1.bf16.msra.mxu0 0
      %346 = vmatprep.subr.bf16.mxu0 0
      %347 = vmatpush1.bf16.msra.mxu0 0
      %348 = vmatprep.subr.bf16.mxu0 0
      %349 = vmatpush1.bf16.msra.mxu0 0
      %350 = vmatprep.subr.bf16.mxu0 0
      %351 = vmatpush1.bf16.msra.mxu0 0
      %352 = vmatprep.subr.bf16.mxu0 0
      %353 = vmatpush1.bf16.msra.mxu0 0
      %354 = vmatprep.subr.bf16.mxu0 0
      %355 = vmatpush1.bf16.msra.mxu0 0
      %356 = vmatprep.subr.bf16.mxu0 0
      %357 = vmatpush1.bf16.msra.mxu0 0
      %358 = vmatprep.subr.bf16.mxu0 0
      %359 = vmatpush1.bf16.msra.mxu0 0
      %360 = vmatprep.mubr.bf16.mxu0 0
      %361 = vmatmul.mubr.bf16.gmra.mrb[0].mxu0 %v301
      %v362 = vpop.f32.mrb[0].mxu0
      %v363 = vadd.f32 0.0, %v362
      %v364 = vpop.f32.mrb[0].mxu0
      %v365 = vpop.f32.mrb[0].mxu0
      %v366 = vadd.f32 0.0, %v365
      %v367 = vpop.f32.mrb[0].mxu0
      %368 = vmatprep.mubr.bf16.mxu0 0
      %369 = vmatmul.mubr.bf16.gmra.mrb[0].mxu0 %v304
      %v370 = vpop.f32.mrb[0].mxu0
      %v371 = vadd.f32 0.0, %v370
      %v372 = vpop.f32.mrb[0].mxu0
      %v373 = vpop.f32.mrb[0].mxu0
      %v374 = vadd.f32 0.0, %v373
      %v375 = vpop.f32.mrb[0].mxu0
      %376 = vmatprep.mubr.bf16.mxu0 0
      %377 = vmatmul.mubr.bf16.gmra.mrb[0].mxu0 %v307
      %v378 = vpop.f32.mrb[0].mxu0
      %v379 = vadd.f32 0.0, %v378
      %v380 = vpop.f32.mrb[0].mxu0
      %v381 = vpop.f32.mrb[0].mxu0
      %v382 = vadd.f32 0.0, %v381
      %v383 = vpop.f32.mrb[0].mxu0
      %384 = vmatprep.mubr.bf16.mxu0 0
      %385 = vmatmul.mubr.bf16.gmra.mrb[0].mxu0 %v310
      %v386 = vpop.f32.mrb[0].mxu0
      %v387 = vadd.f32 0.0, %v386
      %v388 = vpop.f32.mrb[0].mxu0
      %v389 = vpop.f32.mrb[0].mxu0
      %v390 = vadd.f32 0.0, %v389
      %v391 = vpop.f32.mrb[0].mxu0
      %392 = vmatprep.mubr.bf16.mxu0 0
      %393 = vmatmul.mubr.bf16.gmra.mrb[0].mxu0 %v313
      %v394 = vpop.f32.mrb[0].mxu0
      %v395 = vadd.f32 0.0, %v394
      %v396 = vpop.f32.mrb[0].mxu0
      %v397 = vpop.f32.mrb[0].mxu0
      %v398 = vadd.f32 0.0, %v397
      %v399 = vpop.f32.mrb[0].mxu0
      %400 = vmatprep.mubr.bf16.mxu0 0
      %401 = vmatmul.mubr.bf16.gmra.mrb[0].mxu0 %v316
      %v402 = vpop.f32.mrb[0].mxu0
      %v403 = vadd.f32 0.0, %v402
      %v404 = vpop.f32.mrb[0].mxu0
      %v405 = vpop.f32.mrb[0].mxu0
      %v406 = vadd.f32 0.0, %v405
      %v407 = vpop.f32.mrb[0].mxu0
      %408 = vmatprep.mubr.bf16.mxu0 0
      %409 = vmatmul.mubr.bf16.gmra.mrb[0].mxu0 %v319
      %v410 = vpop.f32.mrb[0].mxu0
      %v411 = vadd.f32 0.0, %v410
      %v412 = vpop.f32.mrb[0].mxu0
      %v413 = vpop.f32.mrb[0].mxu0
      %v414 = vadd.f32 0.0, %v413
      %v415 = vpop.f32.mrb[0].mxu0
      %416 = vmatprep.mubr.bf16.mxu0 0
      %417 = vmatmul.mubr.bf16.gmra.mrb[0].mxu0 %v322
      %v418 = vpop.f32.mrb[0].mxu0
      %v419 = vadd.f32 0.0, %v418
      %v420 = vpop.f32.mrb[0].mxu0
      %v421 = vpop.f32.mrb[0].mxu0
      %v422 = vadd.f32 0.0, %v421
      %v423 = vpop.f32.mrb[0].mxu0
      %424 = vdwg.mxu0
      %vm425 = vcmask 64512
      %426 = vst.msk [vmem:[%s212] sm:$0xff] %vm425, %v363
      %427 = vst.msk [vmem:[%s212 + $0x8] sm:$0xff] %vm425, %v366
      %428 = vst.msk [vmem:[%s212 + $0x10] sm:$0xff] %vm425, %v371
      %429 = vst.msk [vmem:[%s212 + $0x18] sm:$0xff] %vm425, %v374
      %430 = vst.msk [vmem:[%s212 + $0x20] sm:$0xff] %vm425, %v379
      %431 = vst.msk [vmem:[%s212 + $0x28] sm:$0xff] %vm425, %v382
      %432 = vst.msk [vmem:[%s212 + $0x30] sm:$0xff] %vm425, %v387
      %433 = vst.msk [vmem:[%s212 + $0x38] sm:$0xff] %vm425, %v390
      %434 = vst.msk [vmem:[%s212 + $0x40] sm:$0xff] %vm425, %v395
      %435 = vst.msk [vmem:[%s212 + $0x48] sm:$0xff] %vm425, %v398
      %436 = vst.msk [vmem:[%s212 + $0x50] sm:$0xff] %vm425, %v403
      %437 = vst.msk [vmem:[%s212 + $0x58] sm:$0xff] %vm425, %v406
      %438 = vst.msk [vmem:[%s212 + $0x60] sm:$0xff] %vm425, %v411
      %439 = vst.msk [vmem:[%s212 + $0x68] sm:$0xff] %vm425, %v414
      %440 = vst.msk [vmem:[%s212 + $0x70] sm:$0xff] %vm425, %v419
      %441 = vst.msk [vmem:[%s212 + $0x78] sm:$0xff] %vm425, %v422
      %v442 = vsel %vm425, %v363, 0.0
      %v443 = vsel %vm425, %v366, 0.0
      %v444 = vadd.f32 %v442, %v443
      %v445 = vsel %vm425, %v371, 0.0
      %v446 = vadd.f32 %v444, %v445
      %v447 = vsel %vm425, %v374, 0.0
      %v448 = vadd.f32 %v446, %v447
      %v449 = vsel %vm425, %v379, 0.0
      %v450 = vadd.f32 %v448, %v449
      %v451 = vsel %vm425, %v382, 0.0
      %v452 = vadd.f32 %v450, %v451
      %v453 = vsel %vm425, %v387, 0.0
      %v454 = vadd.f32 %v452, %v453
      %v455 = vsel %vm425, %v390, 0.0
      %v456 = vadd.f32 %v454, %v455
      %v457 = vsel %vm425, %v395, 0.0
      %v458 = vadd.f32 %v456, %v457
      %v459 = vsel %vm425, %v398, 0.0
      %v460 = vadd.f32 %v458, %v459
      %v461 = vsel %vm425, %v403, 0.0
      %v462 = vadd.f32 %v460, %v461
      %v463 = vsel %vm425, %v406, 0.0
      %v464 = vadd.f32 %v462, %v463
      %v465 = vsel %vm425, %v411, 0.0
      %v466 = vadd.f32 %v464, %v465
      %v467 = vsel %vm425, %v414, 0.0
      %v468 = vadd.f32 %v466, %v467
      %v469 = vsel %vm425, %v419, 0.0
      %v470 = vadd.f32 %v468, %v469
      %v471 = vsel %vm425, %v422, 0.0
      %v472 = vadd.f32 %v470, %v471
      %v473 = vrot.slane %v472, 4
      %v474 = vadd.f32 %v472, %v473
      %v475 = vrot.slane %v474, 2
      %v476 = vadd.f32 %v474, %v475
      %v477 = vrot.slane %v476, 1
      %v478 = vadd.f32 %v476, %v477
      %v479 = vmul.f32 %v363, %v363
      %v480 = vmul.f32 %v366, %v366
      %v481 = vmul.f32 %v371, %v371
      %v482 = vmul.f32 %v374, %v374
      %v483 = vmul.f32 %v379, %v379
      %v484 = vmul.f32 %v382, %v382
      %v485 = vmul.f32 %v387, %v387
      %v486 = vmul.f32 %v390, %v390
      %v487 = vmul.f32 %v395, %v395
      %v488 = vmul.f32 %v398, %v398
      %v489 = vmul.f32 %v403, %v403
      %v490 = vmul.f32 %v406, %v406
      %v491 = vmul.f32 %v411, %v411
      %v492 = vmul.f32 %v414, %v414
      %v493 = vmul.f32 %v419, %v419
      %v494 = vmul.f32 %v422, %v422
      %v495 = vsel %vm425, %v479, 0.0
      %v496 = vsel %vm425, %v480, 0.0
      %v497 = vadd.f32 %v495, %v496
      %v498 = vsel %vm425, %v481, 0.0
      %v499 = vadd.f32 %v497, %v498
      %v500 = vsel %vm425, %v482, 0.0
      %v501 = vadd.f32 %v499, %v500
      %v502 = vsel %vm425, %v483, 0.0
      %v503 = vadd.f32 %v501, %v502
      %v504 = vsel %vm425, %v484, 0.0
      %v505 = vadd.f32 %v503, %v504
      %v506 = vsel %vm425, %v485, 0.0
      %v507 = vadd.f32 %v505, %v506
      %v508 = vsel %vm425, %v486, 0.0
      %v509 = vadd.f32 %v507, %v508
      %v510 = vsel %vm425, %v487, 0.0
      %v511 = vadd.f32 %v509, %v510
      %v512 = vsel %vm425, %v488, 0.0
      %v513 = vadd.f32 %v511, %v512
      %v514 = vsel %vm425, %v489, 0.0
      %v515 = vadd.f32 %v513, %v514
      %v516 = vsel %vm425, %v490, 0.0
      %v517 = vadd.f32 %v515, %v516
      %v518 = vsel %vm425, %v491, 0.0
      %v519 = vadd.f32 %v517, %v518
      %v520 = vsel %vm425, %v492, 0.0
      %v521 = vadd.f32 %v519, %v520
      %v522 = vsel %vm425, %v493, 0.0
      %v523 = vadd.f32 %v521, %v522
      %v524 = vsel %vm425, %v494, 0.0
      %v525 = vadd.f32 %v523, %v524
      %v526 = vrot.slane %v525, 4
      %v527 = vadd.f32 %v525, %v526
      %v528 = vrot.slane %v527, 2
      %v529 = vadd.f32 %v527, %v528
      %v530 = vrot.slane %v529, 1
      %v531 = vadd.f32 %v529, %v530
      %532 = vst.msk [vmem:[%s217] sm:$0xff] %vm425, %v478
      %533 = vst.msk [vmem:[%s221] sm:$0xff] %vm425, %v531
      %s534 = smul.u32 16, %s16
      %p535 = scmp.lt.s32.totalorder %s534, 63
      %s536 = scalar_select %p535, %s534, 63
      %s537 = smul.addr %s536, 8
      %s538 = scalar_lea.vmem %s2, %s537
      %p539 = scmp.lt.s32.totalorder %s16, 3
      %s540 = scalar_select %p539, %s16, 3
      %s541 = smul.addr %s540, 8
      %s542 = scalar_lea.vmem %s3, %s541
      %p543 = scmp.lt.s32.totalorder %s16, 3
      %s544 = scalar_select %p543, %s16, 3
      %s545 = smul.addr %s544, 8
      %s546 = scalar_lea.vmem %s4, %s545
      // Predicated region
      $region29: #{tpu_custom_call.1} parent=27 // pred_check
        %p547 = pneg %p81
      $region30: #{tpu_custom_call.1} parent=27 // pred_check_branch
        %549 = sbr.rel (%p547) target = $region32
      $region31: #{tpu_custom_call.1} parent=27 // pred_region
        %s550 = smul.u32 16, %s16
      $region32: #{tpu_custom_call.1} parent=27 // pred_fallthru
        _
      // Predicated region
      $region33: #{tpu_custom_call.1} parent=27 // pred_check
        %p551 = pneg %p107
      $region34: #{tpu_custom_call.1} parent=27 // pred_check_branch
        %553 = sbr.rel (%p551) target = $region36
      $region35: #{tpu_custom_call.1} parent=27 // pred_region
        _
      $region36: #{tpu_custom_call.1} parent=27 // pred_fallthru
        _
      // Predicated region
      $region37: #{tpu_custom_call.1} parent=27 // pred_check
        %p554 = pneg %p133
      $region38: #{tpu_custom_call.1} parent=27 // pred_check_branch
        %556 = sbr.rel (%p554) target = $region40
      $region39: #{tpu_custom_call.1} parent=27 // pred_region
        _
      $region40: #{tpu_custom_call.1} parent=27 // pred_fallthru
        _
    $region28: #{tpu_custom_call.1} parent=5 // pred_fallthru
      _
    %p557 = scmp.le.s32.totalorder 2, %s11
    // Predicated region
    $region41: #{tpu_custom_call.1} parent=5 // pred_check
      %p558 = pneg %p557
    $region42: #{tpu_custom_call.1} parent=5 // pred_check_branch
      %560 = sbr.rel (%p558) target = $region44
    $region43: #{tpu_custom_call.1} parent=5 // pred_region
      %s561 = ssub.s32 %s11, 2
      // Predicated region
      $region45: #{tpu_custom_call.1} parent=43 // pred_check
        %p562 = pneg %p87
      $region46: #{tpu_custom_call.1} parent=43 // pred_check_branch
        %564 = sbr.rel (%p562) target = $region48
      $region47: #{tpu_custom_call.1} parent=43 // pred_region
        %s565 = smul.u32 16, %s17
        %p566 = scmp.lt.s32.totalorder %s565, 63
        %s567 = scalar_select %p566, %s565, 63
        %s568 = smul.addr %s567, 8
        %s569 = scalar_lea.vmem %s2, %s568
      $region48: #{tpu_custom_call.1} parent=43 // pred_fallthru
        _
      // Predicated region
      $region49: #{tpu_custom_call.1} parent=43 // pred_check
        %p570 = pneg %p113
      $region50: #{tpu_custom_call.1} parent=43 // pred_check_branch
        %572 = sbr.rel (%p570) target = $region52
      $region51: #{tpu_custom_call.1} parent=43 // pred_region
        %p573 = scmp.lt.s32.totalorder %s17, 3
        %s574 = scalar_select %p573, %s17, 3
        %s575 = smul.addr %s574, 8
        %s576 = scalar_lea.vmem %s3, %s575
      $region52: #{tpu_custom_call.1} parent=43 // pred_fallthru
        _
      // Predicated region
      $region53: #{tpu_custom_call.1} parent=43 // pred_check
        %p577 = pneg %p139
      $region54: #{tpu_custom_call.1} parent=43 // pred_check_branch
        %579 = sbr.rel (%p577) target = $region56
      $region55: #{tpu_custom_call.1} parent=43 // pred_region
        %p580 = scmp.lt.s32.totalorder %s17, 3
        %s581 = scalar_select %p580, %s17, 3
        %s582 = smul.addr %s581, 8
        %s583 = scalar_lea.vmem %s4, %s582
      $region56: #{tpu_custom_call.1} parent=43 // pred_fallthru
        _
    $region44: #{tpu_custom_call.1} parent=5 // pred_fallthru
      _
  $region6: #{tpu_custom_call.1} parent=0 // loop_footer
    %s15 = sadd.s32 1, %s11
  $region7: #{tpu_custom_call.1} parent=0 // loop_footer_branch
    %10 = sbr.rel target = $region3
  $region8: #{tpu_custom_call.1} parent=0 // loop_exit
    _

</llo_original>
